<compile_context>
chip_gen: v6e
topology: v6e:2x2x1
jax: 0.10.0
libtpu: 0.0.40
codegen_flags: <defaults>
</compile_context>

<pallas_src>
import jax
import jax.numpy as jnp
from jax.experimental import pallas as pl
from jax.experimental.pallas import tpu as pltpu


def _lovasz_kernel(err_ref, gt_ref, gts_ref, out_ref,
                   acc_ref, cs_carry_ref, jacc_carry_ref):
    i = pl.program_id(0)
    C, T = err_ref.shape

    @pl.when(i == 0)
    def _():
        acc_ref[...] = jnp.zeros_like(acc_ref)
        cs_carry_ref[...] = jnp.zeros_like(cs_carry_ref)
        jacc_carry_ref[...] = jnp.zeros_like(jacc_carry_ref)

    err = err_ref[...]            # (C, T) f32, errors sorted descending per class
    gt = gt_ref[...]              # (C, T) f32 in {0,1}, same permutation
    gts = gts_ref[...]            # (C, 1) f32, total foreground count per class

    lane = jax.lax.broadcasted_iota(jnp.int32, (C, T), 1)

    # Inclusive cumsum of gt along the lane axis (Hillis-Steele scan: log2(T)
    # rolls + adds on the XLU/VPU), plus the prefix carried from earlier tiles.
    cs = gt
    shift = 1
    while shift < T:
        rolled = pltpu.roll(cs, shift=shift, axis=1)
        cs = cs + jnp.where(lane >= shift, rolled, 0.0)
        shift *= 2
    cs = cs + cs_carry_ref[...]

    # lovasz_grad:
    #   intersection[k] = gts - cumsum(gt)[k]
    #   union[k]        = gts + cumsum(1 - gt)[k] = gts + (k+1) - cumsum(gt)[k]
    #   jaccard[k]      = 1 - intersection/union
    pos = (i * T + lane + 1).astype(jnp.float32)        # 1-based global rank
    intersection = gts - cs
    union = gts + (pos - cs)
    jaccard = 1.0 - intersection / union

    # first difference along the global sorted axis, carried across tiles
    rolled_j = pltpu.roll(jaccard, shift=1, axis=1)
    prev_j = jnp.where(lane == 0,
                       jnp.broadcast_to(jacc_carry_ref[...], jaccard.shape),
                       rolled_j)
    grad = jaccard - prev_j

    # elementwise accumulate; the dot-product reduction is deferred to the end
    acc_ref[...] += err * grad

    cs_carry_ref[...] = cs[:, T - 1:T]
    jacc_carry_ref[...] = jaccard[:, T - 1:T]

    @pl.when(i == pl.num_programs(0) - 1)
    def _():
        out_ref[...] = jnp.sum(acc_ref[...], axis=1, keepdims=True)   # (C, 1)


def lovasz_softmax(probs, target, *, reduction="mean", tile_m=2048):
    """probs: (N, C, H, W) float probabilities; target: (N, H, W) int labels."""
    n, c, h, w = probs.shape
    assert c >= 2, "kernel assumes multi-class input (C >= 2)"
    m = n * h * w
    tile_m = min(tile_m, m)
    assert m % tile_m == 0, "spatial size must divide the row tile"
    assert tile_m % 128 == 0 or tile_m == m, "tile must be lane-aligned"

    probs = probs.astype(jnp.float32)
    tgt = target.reshape(-1).astype(jnp.int32)                        # (M,) NHW order

    # class-major, lane-dense (C, M) layout; column order matches PyTorch's
    # permute(0,2,3,1).view(-1, C) row order.
    probs_cm = jnp.transpose(probs, (1, 0, 2, 3)).reshape(c, m)
    gt_cm = (tgt[None, :] ==
             jnp.arange(c, dtype=jnp.int32)[:, None]).astype(jnp.float32)  # (C, M)
    err_cm = jnp.abs(gt_cm - probs_cm)                                # (C, M)

    # TODO(synk): torch.sort (full-length descending per-class sort) has no
    # Pallas TPU lowering; it is performed with jax.lax.sort in the wrapper and
    # the kernel consumes the sorted streams.
    neg_sorted, gt_sorted = jax.lax.sort((-err_cm, gt_cm), dimension=1,
                                         is_stable=True, num_keys=1)
    err_sorted = -neg_sorted
    gts = jnp.sum(gt_cm, axis=1, keepdims=True)                       # (C, 1)

    grid = (m // tile_m,)
    losses = pl.pallas_call(
        _lovasz_kernel,
        out_shape=jax.ShapeDtypeStruct((c, 1), jnp.float32),
        grid_spec=pltpu.PrefetchScalarGridSpec(
            num_scalar_prefetch=0,
            grid=grid,
            in_specs=[
                pl.BlockSpec((c, tile_m), lambda i: (0, i)),   # sorted errors
                pl.BlockSpec((c, tile_m), lambda i: (0, i)),   # sorted gt masks
                pl.BlockSpec((c, 1), lambda i: (0, 0)),        # per-class totals
            ],
            out_specs=pl.BlockSpec((c, 1), lambda i: (0, 0)),
            scratch_shapes=[
                pltpu.VMEM((c, tile_m), jnp.float32),          # elementwise acc
                pltpu.VMEM((c, 1), jnp.float32),               # cumsum carry
                pltpu.VMEM((c, 1), jnp.float32),               # jaccard carry
            ],
        ),
        compiler_params=pltpu.CompilerParams(
            # sequential scan over the sorted rank axis (carries) -> arbitrary
            dimension_semantics=("arbitrary",),
        ),
    )(err_sorted, gt_sorted, gts)

    losses = losses[:, 0]
    if reduction == "none":
        return losses
    if reduction == "sum":
        return jnp.sum(losses)
    return jnp.mean(losses)


def _reference_lovasz(probs, target, reduction="mean"):
    n, c, h, w = probs.shape
    inputs = jnp.transpose(probs, (0, 2, 3, 1)).reshape(-1, c)
    tgt = target.reshape(-1)
    losses = []
    for cls in range(c):
        target_c = (tgt == cls).astype(jnp.float32)
        input_c = inputs[:, cls]
        loss_c = jnp.abs(target_c - input_c)
        order = jnp.argsort(-loss_c)
        loss_sorted = loss_c[order]
        gt_sorted = target_c[order]
        gts = gt_sorted.sum()
        inter = gts - jnp.cumsum(gt_sorted)
        union = gts + jnp.cumsum(1.0 - gt_sorted)
        jacc = 1.0 - inter / union
        jacc = jnp.concatenate([jacc[:1], jacc[1:] - jacc[:-1]])
        losses.append(jnp.dot(loss_sorted, jacc))
    losses = jnp.stack(losses)
    if reduction == "none":
        return losses
    if reduction == "sum":
        return losses.sum()
    return losses.mean()


if __name__ == "__main__":
    key = jax.random.PRNGKey(0)
    k1, k2 = jax.random.split(key)

    N, C, H, W = 2, 4, 16, 16
    raw = jax.random.normal(k1, (N, C, H, W), jnp.float32)
    probs = jax.nn.softmax(raw, axis=1)          # module expects probabilities
    target = jax.random.randint(k2, (N, H, W), 0, C, jnp.int32)

    # tile_m=128 -> 4 grid steps, exercising the cross-tile cumsum/jaccard
    # carries (real workloads should sweep tile_m up to ~2048-8192).
    out = lovasz_softmax(probs, target, reduction="mean", tile_m=128)
    out = jax.block_until_ready(out)

    ref = _reference_lovasz(probs, target, reduction="mean")
    assert jnp.allclose(out, ref, rtol=1e-5, atol=1e-5), (out, ref)

    print("KERNEL_OK")
</pallas_src>

<mosaic_0001>
module attributes {stable_mosaic.version = 11 : i64} {
  func.func @_lovasz_kernel(%arg0: i32, %arg1: memref<4x128xf32, #tpu.memory_space<vmem>>, %arg2: memref<4x128xf32, #tpu.memory_space<vmem>>, %arg3: memref<4x1xf32, #tpu.memory_space<vmem>>, %arg4: memref<4x1xf32, #tpu.memory_space<vmem>>, %arg5: memref<4x128xf32, #tpu.memory_space<vmem>>, %arg6: memref<4x1xf32, #tpu.memory_space<vmem>>, %arg7: memref<4x1xf32, #tpu.memory_space<vmem>>) attributes {dimension_semantics = [#tpu.dimension_semantics<arbitrary>], iteration_bounds = array<i64: 4>, scalar_prefetch = 0 : i64, scratch_operands = 3 : i64, tpu.core_type = #tpu.core_type<tc>, window_params = [{transform_indices = @transform_0, window_bounds = array<i64: 4, 128>}, {transform_indices = @transform_1, window_bounds = array<i64: 4, 128>}, {pipeline_mode = #tpu.pipeline_mode<synchronous>, transform_indices = @transform_2, window_bounds = array<i64: 4, 1>}, {pipeline_mode = #tpu.pipeline_mode<synchronous>, transform_indices = @transform_3, window_bounds = array<i64: 4, 1>}]} {
    %c0_i32 = arith.constant 0 : i32
    %0 = arith.cmpi eq, %arg0, %c0_i32 : i32
    %1 = arith.extui %0 : i1 to i32
    %c0_i32_0 = arith.constant 0 : i32
    %2 = arith.cmpi ne, %1, %c0_i32_0 : i32
    scf.if %2 {
      %cst_36 = arith.constant 0.000000e+00 : f32
      %85 = vector.broadcast %cst_36 : f32 to vector<4x128xf32>
      %c0_37 = arith.constant 0 : index
      %c0_38 = arith.constant 0 : index
      %86 = vector.load %arg5[%c0_37, %c0_38] : memref<4x128xf32, #tpu.memory_space<vmem>>, vector<4x128xf32>
      tpu.vector_store %arg5[%c0_37, %c0_38], %85 {strides = array<i32>} : memref<4x128xf32, #tpu.memory_space<vmem>>, vector<4x128xf32>,
      %cst_39 = arith.constant 0.000000e+00 : f32
      %87 = vector.broadcast %cst_39 : f32 to vector<4x1xf32>
      %c0_40 = arith.constant 0 : index
      %c0_41 = arith.constant 0 : index
      %88 = vector.load %arg6[%c0_40, %c0_41] : memref<4x1xf32, #tpu.memory_space<vmem>>, vector<4x1xf32>
      tpu.vector_store %arg6[%c0_40, %c0_41], %87 {strides = array<i32>} : memref<4x1xf32, #tpu.memory_space<vmem>>, vector<4x1xf32>,
      %cst_42 = arith.constant 0.000000e+00 : f32
      %89 = vector.broadcast %cst_42 : f32 to vector<4x1xf32>
      %c0_43 = arith.constant 0 : index
      %c0_44 = arith.constant 0 : index
      %90 = vector.load %arg7[%c0_43, %c0_44] : memref<4x1xf32, #tpu.memory_space<vmem>>, vector<4x1xf32>
      tpu.vector_store %arg7[%c0_43, %c0_44], %89 {strides = array<i32>} : memref<4x1xf32, #tpu.memory_space<vmem>>, vector<4x1xf32>,
    } else {
    }
    %c0 = arith.constant 0 : index
    %c0_1 = arith.constant 0 : index
    %3 = vector.load %arg1[%c0, %c0_1] : memref<4x128xf32, #tpu.memory_space<vmem>>, vector<4x128xf32>
    %c0_2 = arith.constant 0 : index
    %c0_3 = arith.constant 0 : index
    %4 = vector.load %arg2[%c0_2, %c0_3] : memref<4x128xf32, #tpu.memory_space<vmem>>, vector<4x128xf32>
    %c0_4 = arith.constant 0 : index
    %c0_5 = arith.constant 0 : index
    %5 = vector.load %arg3[%c0_4, %c0_5] : memref<4x1xf32, #tpu.memory_space<vmem>>, vector<4x1xf32>
    %6 = tpu.iota {dimensions = array<i32: 1>} : vector<4x128xi32>
    %c1_i32 = arith.constant 1 : i32
    %7 = tpu.dynamic_rotate %4 by %c1_i32 dim 1 : vector<4x128xf32>, i32 -> vector<4x128xf32>
    %c1_i32_6 = arith.constant 1 : i32
    %8 = vector.broadcast %c1_i32_6 : i32 to vector<4x128xi32>
    %9 = arith.cmpi sge, %6, %8 : vector<4x128xi32>
    %cst = arith.constant 0.000000e+00 : f32
    %10 = vector.broadcast %cst : f32 to vector<4x128xf32>
    %11 = arith.select %9, %7, %10 : vector<4x128xi1>, vector<4x128xf32>
    %12 = arith.addf %4, %11 : vector<4x128xf32>
    %c2_i32 = arith.constant 2 : i32
    %13 = tpu.dynamic_rotate %12 by %c2_i32 dim 1 : vector<4x128xf32>, i32 -> vector<4x128xf32>
    %c2_i32_7 = arith.constant 2 : i32
    %14 = vector.broadcast %c2_i32_7 : i32 to vector<4x128xi32>
    %15 = arith.cmpi sge, %6, %14 : vector<4x128xi32>
    %cst_8 = arith.constant 0.000000e+00 : f32
    %16 = vector.broadcast %cst_8 : f32 to vector<4x128xf32>
    %17 = arith.select %15, %13, %16 : vector<4x128xi1>, vector<4x128xf32>
    %18 = arith.addf %12, %17 : vector<4x128xf32>
    %c4_i32 = arith.constant 4 : i32
    %19 = tpu.dynamic_rotate %18 by %c4_i32 dim 1 : vector<4x128xf32>, i32 -> vector<4x128xf32>
    %c4_i32_9 = arith.constant 4 : i32
    %20 = vector.broadcast %c4_i32_9 : i32 to vector<4x128xi32>
    %21 = arith.cmpi sge, %6, %20 : vector<4x128xi32>
    %cst_10 = arith.constant 0.000000e+00 : f32
    %22 = vector.broadcast %cst_10 : f32 to vector<4x128xf32>
    %23 = arith.select %21, %19, %22 : vector<4x128xi1>, vector<4x128xf32>
    %24 = arith.addf %18, %23 : vector<4x128xf32>
    %c8_i32 = arith.constant 8 : i32
    %25 = tpu.dynamic_rotate %24 by %c8_i32 dim 1 : vector<4x128xf32>, i32 -> vector<4x128xf32>
    %c8_i32_11 = arith.constant 8 : i32
    %26 = vector.broadcast %c8_i32_11 : i32 to vector<4x128xi32>
    %27 = arith.cmpi sge, %6, %26 : vector<4x128xi32>
    %cst_12 = arith.constant 0.000000e+00 : f32
    %28 = vector.broadcast %cst_12 : f32 to vector<4x128xf32>
    %29 = arith.select %27, %25, %28 : vector<4x128xi1>, vector<4x128xf32>
    %30 = arith.addf %24, %29 : vector<4x128xf32>
    %c16_i32 = arith.constant 16 : i32
    %31 = tpu.dynamic_rotate %30 by %c16_i32 dim 1 : vector<4x128xf32>, i32 -> vector<4x128xf32>
    %c16_i32_13 = arith.constant 16 : i32
    %32 = vector.broadcast %c16_i32_13 : i32 to vector<4x128xi32>
    %33 = arith.cmpi sge, %6, %32 : vector<4x128xi32>
    %cst_14 = arith.constant 0.000000e+00 : f32
    %34 = vector.broadcast %cst_14 : f32 to vector<4x128xf32>
    %35 = arith.select %33, %31, %34 : vector<4x128xi1>, vector<4x128xf32>
    %36 = arith.addf %30, %35 : vector<4x128xf32>
    %c32_i32 = arith.constant 32 : i32
    %37 = tpu.dynamic_rotate %36 by %c32_i32 dim 1 : vector<4x128xf32>, i32 -> vector<4x128xf32>
    %c32_i32_15 = arith.constant 32 : i32
    %38 = vector.broadcast %c32_i32_15 : i32 to vector<4x128xi32>
    %39 = arith.cmpi sge, %6, %38 : vector<4x128xi32>
    %cst_16 = arith.constant 0.000000e+00 : f32
    %40 = vector.broadcast %cst_16 : f32 to vector<4x128xf32>
    %41 = arith.select %39, %37, %40 : vector<4x128xi1>, vector<4x128xf32>
    %42 = arith.addf %36, %41 : vector<4x128xf32>
    %c64_i32 = arith.constant 64 : i32
    %43 = tpu.dynamic_rotate %42 by %c64_i32 dim 1 : vector<4x128xf32>, i32 -> vector<4x128xf32>
    %c64_i32_17 = arith.constant 64 : i32
    %44 = vector.broadcast %c64_i32_17 : i32 to vector<4x128xi32>
    %45 = arith.cmpi sge, %6, %44 : vector<4x128xi32>
    %cst_18 = arith.constant 0.000000e+00 : f32
    %46 = vector.broadcast %cst_18 : f32 to vector<4x128xf32>
    %47 = arith.select %45, %43, %46 : vector<4x128xi1>, vector<4x128xf32>
    %48 = arith.addf %42, %47 : vector<4x128xf32>
    %c0_19 = arith.constant 0 : index
    %c0_20 = arith.constant 0 : index
    %49 = vector.load %arg6[%c0_19, %c0_20] : memref<4x1xf32, #tpu.memory_space<vmem>>, vector<4x1xf32>
    %50 = vector.broadcast %49 : vector<4x1xf32> to vector<4x128xf32>
    %51 = arith.addf %48, %50 : vector<4x128xf32>
    %c128_i32 = arith.constant 128 : i32
    %52 = arith.muli %arg0, %c128_i32 : i32
    %53 = vector.broadcast %52 : i32 to vector<4x128xi32>
    %54 = arith.addi %53, %6 : vector<4x128xi32>
    %c1_i32_21 = arith.constant 1 : i32
    %55 = vector.broadcast %c1_i32_21 : i32 to vector<4x128xi32>
    %56 = arith.addi %54, %55 : vector<4x128xi32>
    %57 = arith.sitofp %56 : vector<4x128xi32> to vector<4x128xf32>
    %58 = vector.broadcast %5 : vector<4x1xf32> to vector<4x128xf32>
    %59 = arith.subf %58, %51 : vector<4x128xf32>
    %60 = arith.subf %57, %51 : vector<4x128xf32>
    %61 = vector.broadcast %5 : vector<4x1xf32> to vector<4x128xf32>
    %62 = arith.addf %61, %60 : vector<4x128xf32>
    %63 = arith.divf %59, %62 : vector<4x128xf32>
    %cst_22 = arith.constant 1.000000e+00 : f32
    %64 = vector.broadcast %cst_22 : f32 to vector<4x128xf32>
    %65 = arith.subf %64, %63 : vector<4x128xf32>
    %c1_i32_23 = arith.constant 1 : i32
    %66 = tpu.dynamic_rotate %65 by %c1_i32_23 dim 1 : vector<4x128xf32>, i32 -> vector<4x128xf32>
    %c0_i32_24 = arith.constant 0 : i32
    %67 = vector.broadcast %c0_i32_24 : i32 to vector<4x128xi32>
    %68 = arith.cmpi eq, %6, %67 : vector<4x128xi32>
    %c0_25 = arith.constant 0 : index
    %c0_26 = arith.constant 0 : index
    %69 = vector.load %arg7[%c0_25, %c0_26] : memref<4x1xf32, #tpu.memory_space<vmem>>, vector<4x1xf32>
    %70 = vector.shape_cast %69 : vector<4x1xf32> to vector<4x1xf32>
    %71 = vector.broadcast %70 : vector<4x1xf32> to vector<4x128xf32>
    %72 = arith.select %68, %71, %66 : vector<4x128xi1>, vector<4x128xf32>
    %73 = arith.subf %65, %72 : vector<4x128xf32>
    %c0_27 = arith.constant 0 : index
    %c0_28 = arith.constant 0 : index
    %74 = vector.load %arg5[%c0_27, %c0_28] : memref<4x128xf32, #tpu.memory_space<vmem>>, vector<4x128xf32>
    %75 = arith.mulf %3, %73 : vector<4x128xf32>
    %76 = arith.addf %74, %75 : vector<4x128xf32>
    %c0_29 = arith.constant 0 : index
    %c0_30 = arith.constant 0 : index
    %77 = vector.load %arg5[%c0_29, %c0_30] : memref<4x128xf32, #tpu.memory_space<vmem>>, vector<4x128xf32>
    tpu.vector_store %arg5[%c0_29, %c0_30], %76 {strides = array<i32>} : memref<4x128xf32, #tpu.memory_space<vmem>>, vector<4x128xf32>,
    %78 = vector.extract_strided_slice %51 {offsets = [0, 127], sizes = [4, 1], strides = [1, 1]} : vector<4x128xf32> to vector<4x1xf32>
    %c0_31 = arith.constant 0 : index
    %c0_32 = arith.constant 0 : index
    %79 = vector.load %arg6[%c0_31, %c0_32] : memref<4x1xf32, #tpu.memory_space<vmem>>, vector<4x1xf32>
    tpu.vector_store %arg6[%c0_31, %c0_32], %78 {strides = array<i32>} : memref<4x1xf32, #tpu.memory_space<vmem>>, vector<4x1xf32>,
    %80 = vector.extract_strided_slice %65 {offsets = [0, 127], sizes = [4, 1], strides = [1, 1]} : vector<4x128xf32> to vector<4x1xf32>
    %c0_33 = arith.constant 0 : index
    %c0_34 = arith.constant 0 : index
    %81 = vector.load %arg7[%c0_33, %c0_34] : memref<4x1xf32, #tpu.memory_space<vmem>>, vector<4x1xf32>
    tpu.vector_store %arg7[%c0_33, %c0_34], %80 {strides = array<i32>} : memref<4x1xf32, #tpu.memory_space<vmem>>, vector<4x1xf32>,
    %c3_i32 = arith.constant 3 : i32
    %82 = arith.cmpi eq, %arg0, %c3_i32 : i32
    %83 = arith.extui %82 : i1 to i32
    %c0_i32_35 = arith.constant 0 : i32
    %84 = arith.cmpi ne, %83, %c0_i32_35 : i32
    scf.if %84 {
      %c0_36 = arith.constant 0 : index
      %c0_37 = arith.constant 0 : index
      %85 = vector.load %arg5[%c0_36, %c0_37] : memref<4x128xf32, #tpu.memory_space<vmem>>, vector<4x128xf32>
      %cst_38 = arith.constant dense<0.000000e+00> : vector<4xf32>
      %86 = vector.multi_reduction <add>, %85, %cst_38 [1] : vector<4x128xf32> to vector<4xf32>
      %87 = vector.shape_cast %86 : vector<4xf32> to vector<4x1xf32>
      %c0_39 = arith.constant 0 : index
      %c0_40 = arith.constant 0 : index
      %88 = vector.load %arg4[%c0_39, %c0_40] : memref<4x1xf32, #tpu.memory_space<vmem>>, vector<4x1xf32>
      tpu.vector_store %arg4[%c0_39, %c0_40], %87 {strides = array<i32>} : memref<4x1xf32, #tpu.memory_space<vmem>>, vector<4x1xf32>,
    } else {
    }
    return
  }
  func.func @transform_0(%arg0: i32) -> (i32, i32) {
    %c0_i32 = arith.constant 0 : i32
    %c0_i32_0 = arith.constant 0 : i32
    return %c0_i32, %arg0 : i32, i32
  }
  func.func @transform_1(%arg0: i32) -> (i32, i32) {
    %c0_i32 = arith.constant 0 : i32
    %c0_i32_0 = arith.constant 0 : i32
    return %c0_i32, %arg0 : i32, i32
  }
  func.func @transform_2(%arg0: i32) -> (i32, i32) {
    %c0_i32 = arith.constant 0 : i32
    %c0_i32_0 = arith.constant 0 : i32
    %c0_i32_1 = arith.constant 0 : i32
    return %c0_i32, %c0_i32_0 : i32, i32
  }
  func.func @transform_3(%arg0: i32) -> (i32, i32) {
    %c0_i32 = arith.constant 0 : i32
    %c0_i32_0 = arith.constant 0 : i32
    %c0_i32_1 = arith.constant 0 : i32
    return %c0_i32, %c0_i32_0 : i32, i32
  }
}

</mosaic_0001>

<llo_original>
// kernel: tpu_custom_call.1
$region0: #{tpu_custom_call.1}
  #allocation0 [shape = 'u32[]', space=smem, size = 0x4, offset = 0x4, fixed_abs, tag = 'smem constant byte address 0x4 - core index']
  #allocation1 [shape = 'u32[144,128]{1,0:T(1,128)}', space=vmem, size = 0x12000, scoped, tag = 'internal scratch']
  #allocation2 [shape = 'f32[4,128]{1,0:T(4,128)}', space=vmem, size = 0x800, scoped, tag = 'scratch operand']
  #allocation3 [shape = 'f32[4,1]{1,0:T(4,128)}', space=vmem, size = 0x800, scoped, tag = 'scratch operand']
  #allocation4 [shape = 'f32[4,1]{1,0:T(4,128)}', space=vmem, size = 0x800, scoped, tag = 'scratch operand']
  %s0 = inlined_call_operand.hbm [shape: f32[4,512], index: 0, kind: input, shape index: {}]
  %s1 = inlined_call_operand.hbm [shape: f32[4,512], index: 1, kind: input, shape index: {}]
  %s2 = inlined_call_operand.vmem [shape: f32[4,1], index: 2, kind: input, shape index: {}]
  %s3 = inlined_call_operand.vmem [shape: f32[4,1], index: 3, kind: output, shape index: {}]
  %s4 = sld [smem:[#allocation0]]
  $region61: #{tpu_custom_call.1} parent=0
    _
  %s6 = ssub.s32 1, %s4
  %s7 = scalar_select 0, %s6, %s4
  $region1: #{tpu_custom_call.1} parent=0
    #allocation5 [shape = 'u8[4096]{0}', space=vmem, size = 0x1000, scoped, tag = 'input window, operand 0']
    #allocation6 [shape = 's32[2]{0}', space=sflag, size = 0x8, scoped, tag = 'scoped memory for tpu_custom_call.1']
    #allocation7 [shape = 'u8[4096]{0}', space=vmem, size = 0x1000, scoped, tag = 'input window, operand 1']
    #allocation8 [shape = 's32[2]{0}', space=sflag, size = 0x8, scoped, tag = 'scoped memory for tpu_custom_call.1']
    %8 = vsyncpa [#allocation6], 0
    %s9 = scalar_lea.sflag [#allocation6], 1
    %10 = vsyncpa %s9, 0
    %11 = vsyncpa [#allocation8], 0
    %s12 = scalar_lea.sflag [#allocation8], 1
    %13 = vsyncpa %s12, 0
    loop: start=0, step=1, limit=6
    $region2: #{tpu_custom_call.1} parent=1 // loop_pre_header
      _
    $region3: #{tpu_custom_call.1} parent=1 // loop_header
      %s15 = sphi 0, %s19
      %p16 = scmp.ge.s32.totalorder %s15, 6
      %s25 = sphi 0, %s27
      %s28 = sphi 0, %s25
      %s29 = sphi 0, %s28
      %s45 = sphi 0, %s29
      %s51 = sphi 0, %s53
      %s54 = sphi 0, %s51
      %s55 = sphi 0, %s54
      %s71 = sphi 0, %s55
      %s75 = sphi 0, %s75
      %s77 = sphi 0, %s75
      %s78 = sphi 0, %s77
      %s92 = sphi 0, %s78
      %s96 = sphi 0, %s96
      %s98 = sphi 0, %s96
      %s99 = sphi 0, %s98
      %s113 = sphi 0, %s99
    $region4: #{tpu_custom_call.1} parent=1 // loop_header_branch
      %18 = sbr.rel (%p16) target = $region8
    $region5: #{tpu_custom_call.1} parent=1 // loop_body
      %s20 = ssub.s32 %s15, 1
      %s21 = ssub.s32 %s15, 2
      %s22 = sadd.s32 %s15, 1
      %s23 = ssub.s32 %s15, %s22
      %p24 = scmp.eq.s32.totalorder %s23, 0
      %s26 = sadd.s32 %s25, 1
      %s27 = scalar_select %p24, %s25, %s26
      %p30 = pneg %p24
      %p31 = scmp.eq.s32.totalorder %s15, 3
      %p32 = por %p30, %p31
      %p33 = scmp.ne.s32.totalorder %s25, %s28
      %p34 = scmp.eq.s32.totalorder %s15, 0
      %p35 = por %p33, %p34
      %p36 = scmp.ne.s32.totalorder %s25, %s28
      %p37 = scmp.eq.s32.totalorder %s20, 3
      %p38 = por %p36, %p37
      %p39 = scmp.ne.s32.totalorder %s28, %s29
      %p40 = scmp.eq.s32.totalorder %s20, 0
      %p41 = por %p39, %p40
      %p42 = scmp.ne.s32.totalorder %s28, %s29
      %p43 = scmp.eq.s32.totalorder %s21, 3
      %p44 = por %p42, %p43
      %p46 = scmp.ne.s32.totalorder %s29, %s45
      %p47 = scmp.eq.s32.totalorder %s21, 0
      %p48 = por %p46, %p47
      %s49 = ssub.s32 %s15, %s22
      %p50 = scmp.eq.s32.totalorder %s49, 0
      %s52 = sadd.s32 %s51, 1
      %s53 = scalar_select %p50, %s51, %s52
      %p56 = pneg %p50
      %p57 = scmp.eq.s32.totalorder %s15, 3
      %p58 = por %p56, %p57
      %p59 = scmp.ne.s32.totalorder %s51, %s54
      %p60 = scmp.eq.s32.totalorder %s15, 0
      %p61 = por %p59, %p60
      %p62 = scmp.ne.s32.totalorder %s51, %s54
      %p63 = scmp.eq.s32.totalorder %s20, 3
      %p64 = por %p62, %p63
      %p65 = scmp.ne.s32.totalorder %s54, %s55
      %p66 = scmp.eq.s32.totalorder %s20, 0
      %p67 = por %p65, %p66
      %p68 = scmp.ne.s32.totalorder %s54, %s55
      %p69 = scmp.eq.s32.totalorder %s21, 3
      %p70 = por %p68, %p69
      %p72 = scmp.ne.s32.totalorder %s55, %s71
      %p73 = scmp.eq.s32.totalorder %s21, 0
      %p74 = por %p72, %p73
      %s76 = sadd.s32 %s75, 1
      %p79 = scmp.eq.s32.totalorder %s15, 3
      %p80 = scmp.ne.s32.totalorder %s75, %s77
      %p81 = scmp.eq.s32.totalorder %s15, 0
      %p82 = por %p80, %p81
      %p83 = scmp.ne.s32.totalorder %s75, %s77
      %p84 = scmp.eq.s32.totalorder %s20, 3
      %p85 = por %p83, %p84
      %p86 = scmp.ne.s32.totalorder %s77, %s78
      %p87 = scmp.eq.s32.totalorder %s20, 0
      %p88 = por %p86, %p87
      %p89 = scmp.ne.s32.totalorder %s77, %s78
      %p90 = scmp.eq.s32.totalorder %s21, 3
      %p91 = por %p89, %p90
      %p93 = scmp.ne.s32.totalorder %s78, %s92
      %p94 = scmp.eq.s32.totalorder %s21, 0
      %p95 = por %p93, %p94
      %s97 = sadd.s32 %s96, 1
      %p100 = scmp.eq.s32.totalorder %s15, 3
      %p101 = scmp.ne.s32.totalorder %s96, %s98
      %p102 = scmp.eq.s32.totalorder %s15, 0
      %p103 = por %p101, %p102
      %p104 = scmp.ne.s32.totalorder %s96, %s98
      %p105 = scmp.eq.s32.totalorder %s20, 3
      %p106 = por %p104, %p105
      %p107 = scmp.ne.s32.totalorder %s98, %s99
      %p108 = scmp.eq.s32.totalorder %s20, 0
      %p109 = por %p107, %p108
      %p110 = scmp.ne.s32.totalorder %s98, %s99
      %p111 = scmp.eq.s32.totalorder %s21, 3
      %p112 = por %p110, %p111
      %p114 = scmp.ne.s32.totalorder %s99, %s113
      %p115 = scmp.eq.s32.totalorder %s21, 0
      %p116 = por %p114, %p115
      %p117 = scmp.le.s32.totalorder 1, %s15
      %p118 = scmp.lt.s32.totalorder %s15, 5
      %p119 = pnand %p117, %p118
      %p120 = pneg %p119
      // Predicated region
      $region9: #{tpu_custom_call.1} parent=5 // pred_check
        _
      $region10: #{tpu_custom_call.1} parent=5 // pred_check_branch
        %122 = sbr.rel (%p119) target = $region12
      $region11: #{tpu_custom_call.1} parent=5 // pred_region
        %s123 = ssub.s32 %s15, 1
        // Predicated region
        $region13: #{tpu_custom_call.1} parent=11 // pred_check
          %p124 = pneg %p88
        $region14: #{tpu_custom_call.1} parent=11 // pred_check_branch
          %126 = sbr.rel (%p124) target = $region16
        $region15: #{tpu_custom_call.1} parent=11 // pred_region
          _
        $region16: #{tpu_custom_call.1} parent=11 // pred_fallthru
          _
      $region12: #{tpu_custom_call.1} parent=5 // pred_fallthru
        _
      %p127 = scmp.lt.s32.totalorder %s15, 4
      // Predicated region
      $region17: #{tpu_custom_call.1} parent=5 // pred_check
        %p128 = pneg %p127
      $region18: #{tpu_custom_call.1} parent=5 // pred_check_branch
        %130 = sbr.rel (%p128) target = $region20
      $region19: #{tpu_custom_call.1} parent=5 // pred_region
        // Predicated region
        $region21: #{tpu_custom_call.1} parent=19 // pred_check
          %p131 = pneg %p35
        $region22: #{tpu_custom_call.1} parent=19 // pred_check_branch
          %133 = sbr.rel (%p131) target = $region24
        $region23: #{tpu_custom_call.1} parent=19 // pred_region
          %s134 = sand.u32 %s25, 1
          %s135 = scalar_lea.sflag [#allocation6], %s134
          %s136 = sand.u32 %s25, 1
          %s137 = smul.addr %s136, 4
          %s138 = scalar_lea.vmem [#allocation5], %s137
          %s140 = ssub.s32 64, 64
          %141 = vsyncadd %s135, %s140
          %s142 = smul.addr %s15, 64
          %s143 = scalar_lea.hbm %s0, %s142
          %s145 = sshll.u32 %s138, 4
          %s146 = int_to_ptr.vmem [resolvable:$true] %s145
          %148 = dma.hbm_to_vmem [thread:$0]  %s143, 64, %s146, %s135
        $region24: #{tpu_custom_call.1} parent=19 // pred_fallthru
          _
        // Predicated region
        $region25: #{tpu_custom_call.1} parent=19 // pred_check
          %p149 = pneg %p61
        $region26: #{tpu_custom_call.1} parent=19 // pred_check_branch
          %151 = sbr.rel (%p149) target = $region28
        $region27: #{tpu_custom_call.1} parent=19 // pred_region
          %s152 = sand.u32 %s51, 1
          %s153 = scalar_lea.sflag [#allocation8], %s152
          %s154 = sand.u32 %s51, 1
          %s155 = smul.addr %s154, 4
          %s156 = scalar_lea.vmem [#allocation7], %s155
          %s158 = ssub.s32 64, 64
          %159 = vsyncadd %s153, %s158
          %s160 = smul.addr %s15, 64
          %s161 = scalar_lea.hbm %s1, %s160
          %s163 = sshll.u32 %s156, 4
          %s164 = int_to_ptr.vmem [resolvable:$true] %s163
          %166 = dma.hbm_to_vmem [thread:$0]  %s161, 64, %s164, %s153
        $region28: #{tpu_custom_call.1} parent=19 // pred_fallthru
          _
      $region20: #{tpu_custom_call.1} parent=5 // pred_fallthru
        _
      %p167 = scmp.le.s32.totalorder 1, %s15
      %p168 = scmp.lt.s32.totalorder %s15, 5
      %p169 = pnand %p167, %p168
      %p170 = pneg %p169
      // Predicated region
      $region29: #{tpu_custom_call.1} parent=5 // pred_check
        _
      $region30: #{tpu_custom_call.1} parent=5 // pred_check_branch
        %172 = sbr.rel (%p169) target = $region32
      $region31: #{tpu_custom_call.1} parent=5 // pred_region
        %s173 = ssub.s32 %s15, 1
        %s174 = sand.u32 %s28, 1
        %s175 = scalar_lea.sflag [#allocation6], %s174
        %s176 = sand.u32 %s28, 1
        %s177 = smul.addr %s176, 4
        %s178 = scalar_lea.vmem [#allocation5], %s177
        // Predicated region
        $region33: #{tpu_custom_call.1} parent=31 // pred_check
          %p179 = pneg %p41
        $region34: #{tpu_custom_call.1} parent=31 // pred_check_branch
          %181 = sbr.rel (%p179) target = $region36
        $region35: #{tpu_custom_call.1} parent=31 // pred_region
          %182 = dma.done %s175, 64
        $region36: #{tpu_custom_call.1} parent=31 // pred_fallthru
          _
        %s183 = sand.u32 %s54, 1
        %s184 = scalar_lea.sflag [#allocation8], %s183
        %s185 = sand.u32 %s54, 1
        %s186 = smul.addr %s185, 4
        %s187 = scalar_lea.vmem [#allocation7], %s186
        // Predicated region
        $region37: #{tpu_custom_call.1} parent=31 // pred_check
          %p188 = pneg %p67
        $region38: #{tpu_custom_call.1} parent=31 // pred_check_branch
          %190 = sbr.rel (%p188) target = $region40
        $region39: #{tpu_custom_call.1} parent=31 // pred_region
          %191 = dma.done %s184, 64
        $region40: #{tpu_custom_call.1} parent=31 // pred_fallthru
          _
        %s192 = sand.u32 %s28, 1
        %s193 = scalar_lea.sflag [#allocation6], %s192
        %s194 = sand.u32 %s28, 1
        %s195 = smul.addr %s194, 4
        %s196 = scalar_lea.vmem [#allocation5], %s195
        %p197 = pneg %p41
        %p198 = pneg %p38
        %s199 = sand.u32 %s54, 1
        %s200 = scalar_lea.sflag [#allocation8], %s199
        %s201 = sand.u32 %s54, 1
        %s202 = smul.addr %s201, 4
        %s203 = scalar_lea.vmem [#allocation7], %s202
        %p204 = pneg %p67
        %p205 = pneg %p64
        %p206 = pneg %p88
        %p207 = pneg %p85
        %p208 = pneg %p109
        %p209 = pneg %p106
        %p210 = scmp.eq.s32.totalorder %s20, 0
        // Predicated region
        $region41: #{tpu_custom_call.1} parent=31 // pred_check
          %p211 = pneg %p210
        $region42: #{tpu_custom_call.1} parent=31 // pred_check_branch
          %213 = sbr.rel (%p211) target = $region44
        $region43: #{tpu_custom_call.1} parent=31 // pred_region
          %214 = vst [vmem:[#allocation2] sm:$0xf] 0.0
          %vm215 = vcmask 3072
          %216 = vst.msk [vmem:[#allocation3] sm:$0xf] %vm215, 0.0
          %217 = vst.msk [vmem:[#allocation4] sm:$0xf] %vm215, 0.0
        $region44: #{tpu_custom_call.1} parent=31 // pred_fallthru
          _
        %v218 = vld [vmem:[%s178] sm:$0xf]
        %v219 = vld [vmem:[%s187] sm:$0xf]
        %v220 = vld [vmem:[%s2] sm:$0xf]
        %v221 = vlaneseq
        %v222 = vand.u32 %v221, 127
        %223 = vrot.lane.b32.xlu0 %v219, 1
        %v224 = vpop.permute.xlu0 %223
        %vm225 = vcmp.ge.s32.totalorder %v222, 1
        %v226 = vsel %vm225, %v224, 0.0
        %v227 = vadd.f32 %v219, %v226
        %228 = vrot.lane.b32.xlu0 %v227, 2
        %v229 = vpop.permute.xlu0 %228
        %vm230 = vcmp.ge.s32.totalorder %v222, 2
        %v231 = vsel %vm230, %v229, 0.0
        %v232 = vadd.f32 %v227, %v231
        %233 = vrot.lane.b32.xlu0 %v232, 4
        %v234 = vpop.permute.xlu0 %233
        %vm235 = vcmp.ge.s32.totalorder %v222, 4
        %v236 = vsel %vm235, %v234, 0.0
        %v237 = vadd.f32 %v232, %v236
        %238 = vrot.lane.b32.xlu0 %v237, 8
        %v239 = vpop.permute.xlu0 %238
        %vm240 = vcmp.ge.s32.totalorder %v222, 8
        %v241 = vsel %vm240, %v239, 0.0
        %v242 = vadd.f32 %v237, %v241
        %243 = vrot.lane.b32.xlu0 %v242, 16
        %v244 = vpop.permute.xlu0 %243
        %vm245 = vcmp.ge.s32.totalorder %v222, 16
        %v246 = vsel %vm245, %v244, 0.0
        %v247 = vadd.f32 %v242, %v246
        %248 = vrot.lane.b32.xlu0 %v247, 32
        %v249 = vpop.permute.xlu0 %248
        %vm250 = vcmp.ge.s32.totalorder %v222, 32
        %v251 = vsel %vm250, %v249, 0.0
        %v252 = vadd.f32 %v247, %v251
        %253 = vrot.lane.b32.xlu0 %v252, 64
        %v254 = vpop.permute.xlu0 %253
        %vm255 = vcmp.ge.s32.totalorder %v222, 64
        %v256 = vsel %vm255, %v254, 0.0
        %v257 = vadd.f32 %v252, %v256
        %v258 = vld [vmem:[#allocation3] sm:$0xf]
        %260 = vset.pattern.permute.xlu0 0
        %261 = vperm.xlu0 %260, %v258
        %v262 = vpop.permute.xlu0 %261
        %v264 = vadd.f32 %v257, %v262
        %s265 = smul.u32 %s20, 128
        %v266 = vstv %s265
        %v267 = vadd.s32 %v266, %v222
        %v268 = vadd.s32 %v267, 1
        %v269 = vcvt.s32.f32 %v268
        %271 = vset.pattern.permute.xlu0 0
        %272 = vperm.xlu0 %271, %v220
        %v273 = vpop.permute.xlu0 %272
        %v275 = vsub.f32 %v273, %v264
        %v276 = vsub.f32 %v269, %v264
        %v277 = vadd.f32 %v273, %v276
        %v278 = vrcp.pop %v277
        %v279 = vmul.f32 %v275, %v278
        %v280 = vsub.f32 1.0, %v279
        %281 = vrot.lane.b32.xlu0 %v280, 1
        %v282 = vpop.permute.xlu0 %281
        %vm283 = vcmp.eq.s32.totalorder %v222, 0
        %v284 = vld [vmem:[#allocation4] sm:$0xf]
        %286 = vset.pattern.permute.xlu0 0
        %287 = vperm.xlu0 %286, %v284
        %v288 = vpop.permute.xlu0 %287
        %v290 = vsel %vm283, %v288, %v282
        %v291 = vsub.f32 %v280, %v290
        %v292 = vld [vmem:[#allocation2] sm:$0xf]
        %v293 = vmul.f32 %v218, %v291
        %v294 = vadd.f32 %v292, %v293
        %295 = vst [vmem:[#allocation2] sm:$0xf] %v294
        %297 = vrot.lane.b32.xlu0 %v264, 1
        %v298 = vpop.permute.xlu0 %297
        %vm300 = vcmask 3072
        %301 = vst.msk [vmem:[#allocation3] sm:$0xf] %vm300, %v298
        %303 = vrot.lane.b32.xlu0 %v280, 1
        %v304 = vpop.permute.xlu0 %303
        %306 = vst.msk [vmem:[#allocation4] sm:$0xf] %vm300, %v304
        %p307 = scmp.eq.s32.totalorder %s20, 3
        // Predicated region
        $region45: #{tpu_custom_call.1} parent=31 // pred_check
          %p308 = pneg %p307
        $region46: #{tpu_custom_call.1} parent=31 // pred_check_branch
          %310 = sbr.rel (%p308) target = $region48
        $region47: #{tpu_custom_call.1} parent=31 // pred_region
          %v311 = vld [vmem:[#allocation2] sm:$0xf]
          %vm312 = vcmask 1043456
          %v313 = vsel %vm312, %v311, 0.0
          %314 = vadd.xlane.f32.xlu0 %v313
          %v315 = vpop.xlane.xlu0 %314
          %316 = vst.msk [vmem:[%s3] sm:$0xf] %vm300, %v315
        $region48: #{tpu_custom_call.1} parent=31 // pred_fallthru
          _
        // Predicated region
        $region49: #{tpu_custom_call.1} parent=31 // pred_check
          %p317 = pneg %p106
        $region50: #{tpu_custom_call.1} parent=31 // pred_check_branch
          %319 = sbr.rel (%p317) target = $region52
        $region51: #{tpu_custom_call.1} parent=31 // pred_region
          _
        $region52: #{tpu_custom_call.1} parent=31 // pred_fallthru
          _
        // Predicated region
        $region53: #{tpu_custom_call.1} parent=31 // pred_check
          %p320 = pneg %p106
        $region54: #{tpu_custom_call.1} parent=31 // pred_check_branch
          %322 = sbr.rel (%p320) target = $region56
        $region55: #{tpu_custom_call.1} parent=31 // pred_region
          _
        $region56: #{tpu_custom_call.1} parent=31 // pred_fallthru
          _
      $region32: #{tpu_custom_call.1} parent=5 // pred_fallthru
        _
      %p323 = scmp.le.s32.totalorder 2, %s15
      // Predicated region
      $region57: #{tpu_custom_call.1} parent=5 // pred_check
        %p324 = pneg %p323
      $region58: #{tpu_custom_call.1} parent=5 // pred_check_branch
        %326 = sbr.rel (%p324) target = $region60
      $region59: #{tpu_custom_call.1} parent=5 // pred_region
        %s327 = ssub.s32 %s15, 2
      $region60: #{tpu_custom_call.1} parent=5 // pred_fallthru
        _
    $region6: #{tpu_custom_call.1} parent=1 // loop_footer
      %s19 = sadd.s32 1, %s15
    $region7: #{tpu_custom_call.1} parent=1 // loop_footer_branch
      %14 = sbr.rel target = $region3
    $region8: #{tpu_custom_call.1} parent=1 // loop_exit
      _
    %328 = vsyncpa [#allocation6], 1
    %s329 = scalar_lea.sflag [#allocation6], 1
    %330 = vsyncpa %s329, 1
    %331 = vsyncpa [#allocation8], 1
    %s332 = scalar_lea.sflag [#allocation8], 1
    %333 = vsyncpa %s332, 1

</llo_original>
